<compile_context>
chip_gen: v6e
topology: v6e:2x2x1
jax: 0.10.0
libtpu: 0.0.40
codegen_flags: <defaults>
</compile_context>

<pallas_src>
import numpy as np

import jax
import jax.numpy as jnp
from jax import lax
from jax.experimental import pallas as pl
from jax.experimental.pallas import tpu as pltpu


def _round_up(x, m):
    return ((x + m - 1) // m) * m


def _cdiv(a, b):
    return (a + b - 1) // b


# ----------------------------------------------------------------------------
# Pallas kernel: rows of the torch-interleaved anchor tensor for one level.
# ----------------------------------------------------------------------------
def _anchor_rows_kernel(pattern_ref, ymask_ref, o_ref):
    """o_ref block: (tile_h, c_pad), c = W*4A lanes live.

    out[y, j] = pattern[j] + y * ymask[j]
      pattern[j] = x*stride_w * (ci even) + cell[a, ci]     (j = x*4A + a*4 + ci)
      ymask[j]   = stride_h   * (ci odd)
    One sublane-broadcast + one lane-broadcast + one FMA + one unmasked
    lane-dense store per block: purely HBM-writeback-bound.
    """
    tile_h = o_ref.shape[0]
    # Tiny (tile_h, 1) column: int iota + convert (no full-block converts).
    y_col = (lax.broadcasted_iota(jnp.int32, (tile_h, 1), 0)
             + pl.program_id(0) * tile_h).astype(jnp.float32)
    o_ref[...] = pattern_ref[...] + y_col * ymask_ref[...]


def _grid_anchors_level(grid_h, grid_w, stride_h, stride_w, cell_anchors,
                        *, max_block_bytes=2 << 20):
    """Anchors for one pyramid level in torch order: (grid_h*grid_w*A, 4)."""
    cell = np.asarray(cell_anchors, np.float32)          # (A, 4)
    num_cell = cell.shape[0]
    c = grid_w * 4 * num_cell                            # interleaved row width
    c_pad = max(_round_up(c, 128), 128)                  # lane-dense output

    # Host-side constants (tiny): pattern row and y-parity mask.
    xs = np.arange(grid_w, dtype=np.float32) * np.float32(stride_w)   # (W,)
    x_par = np.array([1.0, 0.0, 1.0, 0.0], np.float32)                # ci even
    y_par = np.array([0.0, 1.0, 0.0, 1.0], np.float32)                # ci odd
    pattern = (xs[:, None, None] * x_par[None, None, :]
               + cell[None, :, :]).reshape(-1)                        # (c,)
    ymask = np.tile(y_par * np.float32(stride_h), grid_w * num_cell)  # (c,)
    pattern = np.pad(pattern, (0, c_pad - c)).reshape(1, c_pad)
    ymask = np.pad(ymask, (0, c_pad - c)).reshape(1, c_pad)

    # Balanced H tiling: multiple-of-8 rows, ~<=2 MiB per block.
    row_bytes = c_pad * 4
    th_cap = max(8, (max_block_bytes // row_bytes) // 8 * 8)
    n_tiles = max(1, _cdiv(_round_up(grid_h, 8), th_cap))
    # v7x: give large levels >=2 tiles so the "parallel" axis feeds both TCs
    # (costs at most a few padded rows; small levels stay single-tile).
    if n_tiles == 1 and grid_h >= 16 and grid_h * row_bytes > (512 << 10):
        n_tiles = 2
    tile_h = _round_up(_cdiv(grid_h, n_tiles), 8)
    h_pad = n_tiles * tile_h

    out = pl.pallas_call(
        _anchor_rows_kernel,
        out_shape=jax.ShapeDtypeStruct((h_pad, c_pad), jnp.float32),
        grid=(n_tiles,),
        in_specs=[pl.BlockSpec((1, c_pad), lambda i: (0, 0)),
                  pl.BlockSpec((1, c_pad), lambda i: (0, 0))],
        out_specs=pl.BlockSpec((tile_h, c_pad), lambda i: (i, 0)),
        compiler_params=pltpu.CompilerParams(
            dimension_semantics=("parallel",),
            vmem_limit_bytes=32 * 1024 * 1024),
    )(jnp.asarray(pattern), jnp.asarray(ymask))

    # Layout plumbing only: drop row/lane padding and expose (H*W*A, 4).
    return out[:grid_h, :c].reshape(grid_h * grid_w * num_cell, 4)


# ----------------------------------------------------------------------------
# Host-side constant prep (mirrors AnchorGenerator.generate_anchors).
# ----------------------------------------------------------------------------
def _generate_cell_anchors(scales, aspect_ratios):
    scales = np.asarray(scales, dtype=np.float32)
    ar = np.asarray(aspect_ratios, dtype=np.float32)
    h_ratios = np.sqrt(ar)
    w_ratios = (1.0 / h_ratios).astype(np.float32)
    ws = (w_ratios[:, None] * scales[None, :]).reshape(-1)
    hs = (h_ratios[:, None] * scales[None, :]).reshape(-1)
    base = np.stack([-ws, -hs, ws, hs], axis=1) / 2.0
    return np.round(base).astype(np.float32)              # (A, 4), half-to-even


class ImageList:
    def __init__(self, tensors, image_sizes):
        self.tensors = tensors
        self.image_sizes = image_sizes


class AnchorGeneratorPallas:
    def __init__(self, sizes=(128, 256, 512), aspect_ratios=(0.5, 1.0, 2.0)):
        if not isinstance(sizes[0], (list, tuple)):
            sizes = tuple((s,) for s in sizes)
        if not isinstance(aspect_ratios[0], (list, tuple)):
            aspect_ratios = (aspect_ratios,) * len(sizes)
        assert len(sizes) == len(aspect_ratios)
        self.sizes = sizes
        self.aspect_ratios = aspect_ratios
        # Cell anchors depend only on constructor constants: computed once on
        # the host (same values as torch set_cell_anchors) and baked into the
        # per-level pattern rows.
        self.cell_anchors = [_generate_cell_anchors(s, a)
                             for s, a in zip(sizes, aspect_ratios)]
        # Persistent caches keyed on static shapes (torch clears these every
        # forward; we deliberately do not — anchors are shape-only constants).
        self._cache = {}
        self._cat_cache = {}

    def num_anchors_per_location(self):
        return [len(s) * len(a) for s, a in zip(self.sizes, self.aspect_ratios)]

    def grid_anchors(self, grid_sizes, strides):
        # TODO(synk): all pyramid levels could share one scalar-prefetched
        # pallas_call writing straight into the concatenated buffer; kept as
        # one lane-dense call per level because the interleaved row width
        # (W*4A) differs per level and the persistent cache makes the per-call
        # cost a one-off per shape set.
        return [
            _grid_anchors_level(gh, gw, sh, sw, cell)
            for (gh, gw), (sh, sw), cell in zip(grid_sizes, strides,
                                                self.cell_anchors)
        ]

    def cached_grid_anchors(self, grid_sizes, strides):
        key = str(grid_sizes) + str(strides)
        if key in self._cache:
            return self._cache[key]
        anchors = self.grid_anchors(grid_sizes, strides)
        self._cache[key] = anchors
        return anchors

    def forward(self, image_list, feature_maps):
        grid_sizes = [tuple(int(d) for d in fm.shape[-2:]) for fm in feature_maps]
        image_size = tuple(int(d) for d in image_list.tensors.shape[-2:])
        strides = [(image_size[0] // g[0], image_size[1] // g[1])
                   for g in grid_sizes]
        key = str(grid_sizes) + str(strides)
        if key not in self._cat_cache:
            per_level = self.cached_grid_anchors(grid_sizes, strides)
            self._cat_cache[key] = jnp.concatenate(per_level, axis=0)
        anchors_cat = self._cat_cache[key]
        # NOTE: anchors are identical for every image; the SAME immutable JAX
        # array is returned per image (torch returns independent copies).
        return [anchors_cat for _ in image_list.image_sizes]

    __call__ = forward


# ----------------------------------------------------------------------------
# Pure-numpy reference (mirrors the PyTorch module exactly) for verification.
# ----------------------------------------------------------------------------
def _reference_anchors_np(image_size, grid_sizes, sizes, aspect_ratios):
    levels = []
    for (gh, gw), s, a in zip(grid_sizes, sizes, aspect_ratios):
        cell = _generate_cell_anchors(s, a)
        sh = image_size[0] // gh
        sw = image_size[1] // gw
        shifts_x = np.arange(gw, dtype=np.float32) * sw
        shifts_y = np.arange(gh, dtype=np.float32) * sh
        sy, sx = np.meshgrid(shifts_y, shifts_x, indexing="ij")
        sx = sx.reshape(-1)
        sy = sy.reshape(-1)
        shifts = np.stack([sx, sy, sx, sy], axis=1).astype(np.float32)
        levels.append((shifts[:, None, :] + cell[None, :, :]).reshape(-1, 4))
    return np.concatenate(levels, axis=0).astype(np.float32)


# ----------------------------------------------------------------------------
if __name__ == "__main__":
    key = jax.random.PRNGKey(0)
    k_img, k_f1, k_f2 = jax.random.split(key, 3)

    batch, channels = 2, 4
    img_h, img_w = 64, 64
    feat_shapes = [(16, 16), (8, 8)]
    image_sizes = [(64, 64), (60, 56)]

    image_tensors = jax.random.normal(k_img, (batch, 3, img_h, img_w), jnp.float32)
    feature_maps = [
        jax.random.normal(k_f1, (batch, channels, feat_shapes[0][0], feat_shapes[0][1]), jnp.float32),
        jax.random.normal(k_f2, (batch, channels, feat_shapes[1][0], feat_shapes[1][1]), jnp.float32),
    ]
    image_list = ImageList(image_tensors, image_sizes)

    gen = AnchorGeneratorPallas(sizes=(32, 64), aspect_ratios=(0.5, 1.0, 2.0))
    anchors = gen(image_list, feature_maps)
    anchors = [jax.block_until_ready(a) for a in anchors]

    num_anchors = sum(h * w * 3 for h, w in feat_shapes)
    assert len(anchors) == batch
    assert all(a.shape == (num_anchors, 4) for a in anchors)

    ref = _reference_anchors_np((img_h, img_w), feat_shapes, gen.sizes, gen.aspect_ratios)
    for a in anchors:
        np.testing.assert_allclose(np.asarray(a), ref, rtol=0, atol=1e-5)

    # Second call exercises the persistent cache path (pure dict lookup).
    anchors2 = gen(image_list, feature_maps)
    anchors2 = [jax.block_until_ready(a) for a in anchors2]
    for a in anchors2:
        np.testing.assert_allclose(np.asarray(a), ref, rtol=0, atol=1e-5)

    print("KERNEL_OK")
</pallas_src>

<mosaic_0001>
module attributes {stable_mosaic.version = 11 : i64} {
  func.func @_anchor_rows_kernel(%arg0: i32, %arg1: memref<1x256xf32, #tpu.memory_space<vmem>>, %arg2: memref<1x256xf32, #tpu.memory_space<vmem>>, %arg3: memref<16x256xf32, #tpu.memory_space<vmem>>) attributes {dimension_semantics = [#tpu.dimension_semantics<parallel>], iteration_bounds = array<i64: 1>, scalar_prefetch = 0 : i64, scratch_operands = 0 : i64, tpu.core_type = #tpu.core_type<tc>, window_params = [{pipeline_mode = #tpu.pipeline_mode<synchronous>, transform_indices = @transform_0, window_bounds = array<i64: 1, 256>}, {pipeline_mode = #tpu.pipeline_mode<synchronous>, transform_indices = @transform_1, window_bounds = array<i64: 1, 256>}, {transform_indices = @transform_2, window_bounds = array<i64: 16, 256>}]} {
    %0 = tpu.iota {dimensions = array<i32: 0>} : vector<16x1xi32>
    %c16_i32 = arith.constant 16 : i32
    %1 = arith.muli %arg0, %c16_i32 : i32
    %2 = vector.broadcast %1 : i32 to vector<16x1xi32>
    %3 = arith.addi %0, %2 : vector<16x1xi32>
    %4 = arith.sitofp %3 : vector<16x1xi32> to vector<16x1xf32>
    %c0 = arith.constant 0 : index
    %c0_0 = arith.constant 0 : index
    %5 = vector.load %arg1[%c0, %c0_0] : memref<1x256xf32, #tpu.memory_space<vmem>>, vector<1x256xf32>
    %c0_1 = arith.constant 0 : index
    %c0_2 = arith.constant 0 : index
    %6 = vector.load %arg2[%c0_1, %c0_2] : memref<1x256xf32, #tpu.memory_space<vmem>>, vector<1x256xf32>
    %7 = vector.broadcast %4 : vector<16x1xf32> to vector<16x256xf32>
    %8 = vector.broadcast %6 : vector<1x256xf32> to vector<16x256xf32>
    %9 = arith.mulf %7, %8 : vector<16x256xf32>
    %10 = vector.broadcast %5 : vector<1x256xf32> to vector<16x256xf32>
    %11 = arith.addf %10, %9 : vector<16x256xf32>
    %c0_3 = arith.constant 0 : index
    %c0_4 = arith.constant 0 : index
    %12 = vector.load %arg3[%c0_3, %c0_4] : memref<16x256xf32, #tpu.memory_space<vmem>>, vector<16x256xf32>
    tpu.vector_store %arg3[%c0_3, %c0_4], %11 {strides = array<i32>} : memref<16x256xf32, #tpu.memory_space<vmem>>, vector<16x256xf32>,
    return
  }
  func.func @transform_0(%arg0: i32) -> (i32, i32) {
    %c0_i32 = arith.constant 0 : i32
    %c0_i32_0 = arith.constant 0 : i32
    %c0_i32_1 = arith.constant 0 : i32
    return %c0_i32, %c0_i32_0 : i32, i32
  }
  func.func @transform_1(%arg0: i32) -> (i32, i32) {
    %c0_i32 = arith.constant 0 : i32
    %c0_i32_0 = arith.constant 0 : i32
    %c0_i32_1 = arith.constant 0 : i32
    return %c0_i32, %c0_i32_0 : i32, i32
  }
  func.func @transform_2(%arg0: i32) -> (i32, i32) {
    %c0_i32 = arith.constant 0 : i32
    %c0_i32_0 = arith.constant 0 : i32
    return %arg0, %c0_i32 : i32, i32
  }
}

</mosaic_0001>

<llo_original>
// kernel: tpu_custom_call.1
$region0: #{tpu_custom_call.1}
  #allocation0 [shape = 'u32[]', space=smem, size = 0x4, offset = 0x4, fixed_abs, tag = 'smem constant byte address 0x4 - core index']
  #allocation1 [shape = 'u32[144,128]{1,0:T(1,128)}', space=vmem, size = 0x12000, scoped, tag = 'internal scratch']
  %s0 = inlined_call_operand.hbm [shape: f32[1,256], index: 0, kind: input, shape index: {}]
  %s1 = inlined_call_operand.hbm [shape: f32[1,256], index: 1, kind: input, shape index: {}]
  %s2 = inlined_call_operand.hbm [shape: f32[16,256], index: 2, kind: output, shape index: {}]
  %s3 = sld [smem:[#allocation0]]
  $region26: #{tpu_custom_call.1} parent=0
    _
  %s5 = ssub.s32 1, %s3
  %s6 = scalar_select 0, %s5, %s3
  $region1: #{tpu_custom_call.1} parent=0
    #allocation2 [shape = 'u8[1024]{0}', space=vmem, size = 0x400, scoped, tag = 'input window, operand 0, single buffered']
    #allocation3 [shape = 's32[1]{0}', space=sflag, size = 0x4, scoped, tag = 'scoped memory for tpu_custom_call.1']
    #allocation4 [shape = 's32[1]{0}', space=sflag, size = 0x4, scoped, tag = 'scoped memory for tpu_custom_call.1']
    #allocation5 [shape = 'u8[1024]{0}', space=vmem, size = 0x400, scoped, tag = 'input window, operand 1, single buffered']
    #allocation6 [shape = 's32[1]{0}', space=sflag, size = 0x4, scoped, tag = 'scoped memory for tpu_custom_call.1']
    #allocation7 [shape = 'u8[16384]{0}', space=vmem, size = 0x4000, scoped, tag = 'output window, operand 0, single buffered']
    %7 = vsyncpa [#allocation3], 0
    %8 = vsyncpa [#allocation6], 0
    %9 = vsyncpa [#allocation4], 0
    // Predicated region
    $region2: #{tpu_custom_call.1} parent=1 // pred_check
      _
    $region3: #{tpu_custom_call.1} parent=1 // pred_check_branch
      %11 = sbr.rel (0) target = $region5
    $region4: #{tpu_custom_call.1} parent=1 // pred_region
      %s13 = ssub.s32 32, 32
      %14 = vsyncadd [#allocation3], %s13
      %s16 = sshll.u32 [#allocation2], 4
      %s17 = int_to_ptr.vmem [resolvable:$true] %s16
      %19 = dma.hbm_to_vmem [thread:$0]  %s0, 32, %s17, [#allocation3]
    $region5: #{tpu_custom_call.1} parent=1 // pred_fallthru
      _
    // Predicated region
    $region6: #{tpu_custom_call.1} parent=1 // pred_check
      _
    $region7: #{tpu_custom_call.1} parent=1 // pred_check_branch
      %21 = sbr.rel (0) target = $region9
    $region8: #{tpu_custom_call.1} parent=1 // pred_region
      %s23 = ssub.s32 32, 32
      %24 = vsyncadd [#allocation6], %s23
      %s26 = sshll.u32 [#allocation5], 4
      %s27 = int_to_ptr.vmem [resolvable:$true] %s26
      %29 = dma.hbm_to_vmem [thread:$0]  %s1, 32, %s27, [#allocation6]
    $region9: #{tpu_custom_call.1} parent=1 // pred_fallthru
      _
    // Predicated region
    $region10: #{tpu_custom_call.1} parent=1 // pred_check
      _
    $region11: #{tpu_custom_call.1} parent=1 // pred_check_branch
      %31 = sbr.rel (0) target = $region13
    $region12: #{tpu_custom_call.1} parent=1 // pred_region
      %32 = dma.done [#allocation3], 32
    $region13: #{tpu_custom_call.1} parent=1 // pred_fallthru
      _
    // Predicated region
    $region14: #{tpu_custom_call.1} parent=1 // pred_check
      _
    $region15: #{tpu_custom_call.1} parent=1 // pred_check_branch
      %34 = sbr.rel (0) target = $region17
    $region16: #{tpu_custom_call.1} parent=1 // pred_region
      %35 = dma.done [#allocation6], 32
    $region17: #{tpu_custom_call.1} parent=1 // pred_fallthru
      _
    %v36 = vlaneseq
    %v37 = vshrl.u32 %v36, 7
    %v38 = vadd.s32 %v37, 8
    %s39 = smul.u32 0, 16
    %v40 = vstv %s39
    %v41 = vadd.s32 %v37, %v40
    %v42 = vadd.s32 %v38, %v40
    %v43 = vcvt.s32.f32 %v41
    %v44 = vcvt.s32.f32 %v42
    %v45 = vld [vmem:[#allocation2] sm:$0x3]
    %v46 = vld [vmem:[#allocation5] sm:$0x3]
    %v48 = vlaneseq
    %v49 = vshrl.u32 %v48, 7
    %v50 = vsub.s32 0, %v49
    %v51 = vrot.slane %v46, %v50
    %v52 = vlaneseq
    %v53 = vshrl.u32 %v52, 7
    %v54 = vsub.s32 1, %v53
    %v55 = vrot.slane %v46, %v54
    %v58 = vmul.f32 %v43, %v51
    %v59 = vmul.f32 %v43, %v55
    %v60 = vmul.f32 %v44, %v51
    %v61 = vmul.f32 %v44, %v55
    %v63 = vlaneseq
    %v64 = vshrl.u32 %v63, 7
    %v65 = vsub.s32 0, %v64
    %v66 = vrot.slane %v45, %v65
    %v67 = vlaneseq
    %v68 = vshrl.u32 %v67, 7
    %v69 = vsub.s32 1, %v68
    %v70 = vrot.slane %v45, %v69
    %v73 = vadd.f32 %v66, %v58
    %v74 = vadd.f32 %v70, %v59
    %v75 = vadd.f32 %v66, %v60
    %v76 = vadd.f32 %v70, %v61
    %77 = vst [vmem:[#allocation7] sm:$0xff] %v73
    %78 = vst [vmem:[#allocation7 + $0x8] sm:$0xff] %v74
    %79 = vst [vmem:[#allocation7 + $0x10] sm:$0xff] %v75
    %80 = vst [vmem:[#allocation7 + $0x18] sm:$0xff] %v76
    // Predicated region
    $region18: #{tpu_custom_call.1} parent=1 // pred_check
      _
    $region19: #{tpu_custom_call.1} parent=1 // pred_check_branch
      %82 = sbr.rel (0) target = $region21
    $region20: #{tpu_custom_call.1} parent=1 // pred_region
      %s84 = ssub.s32 512, 512
      %85 = vsyncadd [#allocation4], %s84
      %s86 = sshll.u32 [#allocation7], 4
      %s87 = int_to_ptr.vmem [resolvable:$true] %s86
      %92 = dma.vmem_to_hbm [thread:$0]  %s87, 512, %s2, [#allocation4], 256, 256, 16
    $region21: #{tpu_custom_call.1} parent=1 // pred_fallthru
      _
    // Predicated region
    $region22: #{tpu_custom_call.1} parent=1 // pred_check
      _
    $region23: #{tpu_custom_call.1} parent=1 // pred_check_branch
      %94 = sbr.rel (0) target = $region25
    $region24: #{tpu_custom_call.1} parent=1 // pred_region
      %95 = dma.done [#allocation4], 512
    $region25: #{tpu_custom_call.1} parent=1 // pred_fallthru
      _
    %96 = vsyncpa [#allocation3], 1
    %97 = vsyncpa [#allocation6], 1
    %98 = vsyncpa [#allocation4], 1

</llo_original>
